<compile_context>
chip_gen: v6e
topology: v6e:2x2x1
jax: 0.10.0
libtpu: 0.0.40
codegen_flags: <defaults>
</compile_context>

<pallas_src>
import jax
import jax.numpy as jnp
import numpy as np
from jax.experimental import pallas as pl
from jax.experimental.pallas import tpu as pltpu


def _vmem_capacity_bytes():
    """Per-core VMEM capacity; conservative fallback (v7x = 64 MiB)."""
    try:
        info = pltpu.get_tpu_info()
        cap = getattr(info, "vmem_capacity_bytes", None)
        if cap:
            return int(cap)
    except Exception:
        pass
    return 64 * 1024 * 1024


def _pwca_kernel(z_ref, xm_ref, x_ref, w1_ref, b1_ref, w2_ref, b2_ref, out_ref):
    """One grid step: Bb batch elements x one spatial tile of HW.

    z_ref  : (Bb, Kz, C)   f32  template features (pre-transposed)
    xm_ref : (Bb, 1,  C)   f32  spatial mean of x per batch element
    x_ref  : (Bb, C, Thw)  f32  search-feature spatial tile
    w1_ref : (Kz, Cr) f32   b1_ref : (1, Cr) f32
    w2_ref : (Cr, Kz) f32   b2_ref : (1, Kz) f32
    out_ref: (Bb, Kz, Thw)  out dtype
    """
    z = z_ref[...]                                                    # (Bb, Kz, C)

    # Channel attention.  Linearity of the global average pool:
    #   mean_HW(corr)[b, k] = sum_c z[b, k, c] * mean_HW(x)[b, c]
    # so the squeeze vector comes from the tiny x-mean instead of the full corr.
    avg = jnp.sum(z * xm_ref[...], axis=-1)                           # (Bb, Kz)
    h1 = jnp.dot(avg, w1_ref[...], preferred_element_type=jnp.float32) + b1_ref[...]
    h1 = jnp.maximum(h1, 0.0)                                         # (Bb, Cr)
    att = jax.nn.sigmoid(
        jnp.dot(h1, w2_ref[...], preferred_element_type=jnp.float32) + b2_ref[...])

    # Pixel-wise correlation for this spatial tile: batched (Kz, C) @ (C, Thw)
    # on the MXU with f32 accumulation; scaled and streamed straight out.
    corr = jax.lax.dot_general(
        z, x_ref[...],
        dimension_numbers=(((2,), (1,)), ((0,), (0,))),
        preferred_element_type=jnp.float32)                           # (Bb, Kz, Thw)
    out_ref[...] = (corr * att[:, :, None]).astype(out_ref.dtype)


def pwca(z, x, w1, b1, w2, b2, *, out_dtype=jnp.float32):
    """z: (B, C, Hz, Wz) with Hz*Wz == 64; x: (B, C, H, W).

    Returns (B, 64, H, W) in `out_dtype` (default f32 = PyTorch semantics;
    bf16 halves the dominant HBM writeback stream if acceptable).
    """
    B, C, Hz, Wz = z.shape
    Bx, Cx, H, W = x.shape
    assert (B, C) == (Bx, Cx)
    Kz = Hz * Wz
    HW = H * W
    Cr = w1.shape[0]  # reduced channels (64 // 4 = 16)

    f32 = jnp.float32
    # Tiny one-time transpose so the correlation is a plain last-dim contraction.
    z_flat = jnp.asarray(z, f32).reshape(B, C, Kz).transpose(0, 2, 1)   # (B, Kz, C)
    # x passed in its native dtype/layout: the reshape is free (no HBM round-trip).
    x_f32 = jnp.asarray(x, f32)
    x_flat = x_f32.reshape(B, C, HW)                                    # (B, C, HW)
    # Tiny (B, 1, C) spatial mean drives the channel attention.
    x_mean = jnp.mean(x_flat, axis=-1).reshape(B, 1, C)

    # Tiny FC params, transposed for (B, K)@(K, N) matmuls; biases lane-major.
    w1_t = jnp.asarray(w1, f32).T            # (Kz, Cr)
    w2_t = jnp.asarray(w2, f32).T            # (Cr, Kz)
    b1_row = jnp.asarray(b1, f32).reshape(1, Cr)
    b2_row = jnp.asarray(b2, f32).reshape(1, Kz)

    out_bytes = jnp.dtype(out_dtype).itemsize

    # Generation-aware VMEM budgeting (v7x: 64 MiB/core, v5e/v6e: 128 MiB).
    vmem_cap = _vmem_capacity_bytes()
    budget = int(vmem_cap * 0.45)          # headroom for params + compiler scratch
    vmem_limit = int(vmem_cap * 0.80)

    # Spatial tile: lane-dense, per-step VMEM independent of H*W.
    MAX_THW = 2048
    Thw = HW if HW <= MAX_THW else MAX_THW   # full extent is always layout-legal;
                                             # otherwise a multiple of 128 + cdiv grid
                                             # (Pallas masks the ragged tail writes).

    def per_elem(thw):
        return (2 * Kz * C * 4               # z (double-buffered)
                + 2 * C * 4                  # x spatial mean
                + 2 * C * thw * 4            # x tile (double-buffered)
                + 2 * Kz * thw * out_bytes   # output tile (double-buffered)
                + 2 * Kz * thw * 4)          # live f32 corr / scaled intermediates

    param_bytes = 2 * 4 * (Kz * Cr + Cr + Cr * Kz + Kz) + (64 << 10)

    # Shrink the spatial tile first if even one batch element would not fit
    # (only while the halved tile stays 128-aligned).
    while per_elem(Thw) + param_bytes > budget and Thw % 256 == 0 and Thw > 128:
        Thw //= 2
    # If it still does not fit (very large C with non-tileable HW) we proceed at
    # Bb=1 and rely on the raised vmem_limit.

    # Largest batch block that fits the budget (no divisibility requirement:
    # the grid uses cdiv and Pallas masks the ragged batch tail).
    Bb = 1
    for cand in range(2, B + 1):
        if cand * per_elem(Thw) + param_bytes <= budget:
            Bb = cand
        else:
            break

    # Ensure >= 2 grid steps where possible (pipelining + v7x megacore).
    if pl.cdiv(B, Bb) * pl.cdiv(HW, Thw) < 2:
        if B >= 2:
            Bb = pl.cdiv(B, 2)
        elif Thw == HW and HW % 256 == 0:
            Thw = HW // 2

    nb = pl.cdiv(B, Bb)
    nhw = pl.cdiv(HW, Thw)

    out_flat = pl.pallas_call(
        _pwca_kernel,
        out_shape=jax.ShapeDtypeStruct((B, Kz, HW), out_dtype),
        grid_spec=pltpu.PrefetchScalarGridSpec(
            num_scalar_prefetch=0,
            grid=(nb, nhw),
            in_specs=[
                pl.BlockSpec((Bb, Kz, C), lambda i, j: (i, 0, 0)),
                pl.BlockSpec((Bb, 1, C), lambda i, j: (i, 0, 0)),
                pl.BlockSpec((Bb, C, Thw), lambda i, j: (i, 0, j)),
                pl.BlockSpec((Kz, Cr), lambda i, j: (0, 0)),
                pl.BlockSpec((1, Cr), lambda i, j: (0, 0)),
                pl.BlockSpec((Cr, Kz), lambda i, j: (0, 0)),
                pl.BlockSpec((1, Kz), lambda i, j: (0, 0)),
            ],
            out_specs=pl.BlockSpec((Bb, Kz, Thw), lambda i, j: (i, 0, j)),
        ),
        compiler_params=pltpu.CompilerParams(
            dimension_semantics=("parallel", "parallel"),
            vmem_limit_bytes=vmem_limit,
        ),
    )(z_flat, x_mean, x_flat, w1_t, b1_row, w2_t, b2_row)

    return out_flat.reshape(B, Kz, H, W)


def pwca_reference(z, x, w1, b1, w2, b2):
    """Pure-JAX reference mirroring the PyTorch forward (cat=False, CA=True)."""
    B, C, Hz, Wz = z.shape
    _, _, H, W = x.shape
    Kz = Hz * Wz
    z_mat = z.reshape(B, C, Kz).transpose(0, 2, 1)          # (B, Kz, C)
    x_mat = x.reshape(B, C, H * W)                          # (B, C, HW)
    corr = jnp.matmul(z_mat, x_mat)                         # (B, Kz, HW)
    avg = jnp.mean(corr, axis=-1)                           # (B, Kz)
    h1 = jnp.maximum(avg @ w1.T + b1, 0.0)                  # (B, Cr)
    att = jax.nn.sigmoid(h1 @ w2.T + b2)                    # (B, Kz)
    out = corr * att[:, :, None]
    return out.reshape(B, Kz, H, W)


if __name__ == "__main__":
    # Shapes consistent with the module: CAModule(channels=64) requires the
    # correlation to have 64 channels, i.e. z spatial = 8x8.
    B, C = 2, 32
    Hz, Wz = 8, 8          # Kz = 64 correlation channels
    H, W = 16, 16          # x spatial (HW = 256)
    Kz = Hz * Wz
    reduction = 4
    Cr = Kz // reduction   # 16

    key = jax.random.PRNGKey(0)
    kz, kx, kw1, kb1, kw2, kb2 = jax.random.split(key, 6)

    z = jax.random.normal(kz, (B, C, Hz, Wz), dtype=jnp.float32)
    x = jax.random.normal(kx, (B, C, H, W), dtype=jnp.float32)

    # Deterministic "1x1 conv" params for CAModule (fc1: 64->16, fc2: 16->64).
    w1 = jax.random.normal(kw1, (Cr, Kz), dtype=jnp.float32) * 0.05
    b1 = jax.random.normal(kb1, (Cr,), dtype=jnp.float32) * 0.05
    w2 = jax.random.normal(kw2, (Kz, Cr), dtype=jnp.float32) * 0.05
    b2 = jax.random.normal(kb2, (Kz,), dtype=jnp.float32) * 0.05

    out = jax.block_until_ready(pwca(z, x, w1, b1, w2, b2))
    assert out.shape == (B, Kz, H, W)

    # Tolerance accounts for default-precision MXU rounding and the re-associated
    # (mathematically identical) average-pool path; everything stays f32.
    ref = jax.block_until_ready(pwca_reference(z, x, w1, b1, w2, b2))
    np.testing.assert_allclose(np.asarray(out), np.asarray(ref), rtol=2e-2, atol=2e-2)

    print("KERNEL_OK")
</pallas_src>

<mosaic_0001>
module attributes {stable_mosaic.version = 11 : i64} {
  func.func @_pwca_kernel(%arg0: i32, %arg1: i32, %arg2: memref<1x64x32xf32, #tpu.memory_space<vmem>>, %arg3: memref<1x1x32xf32, #tpu.memory_space<vmem>>, %arg4: memref<1x32x256xf32, #tpu.memory_space<vmem>>, %arg5: memref<64x16xf32, #tpu.memory_space<vmem>>, %arg6: memref<1x16xf32, #tpu.memory_space<vmem>>, %arg7: memref<16x64xf32, #tpu.memory_space<vmem>>, %arg8: memref<1x64xf32, #tpu.memory_space<vmem>>, %arg9: memref<1x64x256xf32, #tpu.memory_space<vmem>>) attributes {dimension_semantics = [#tpu.dimension_semantics<parallel>, #tpu.dimension_semantics<parallel>], iteration_bounds = array<i64: 2, 1>, scalar_prefetch = 0 : i64, scratch_operands = 0 : i64, tpu.core_type = #tpu.core_type<tc>, window_params = [{transform_indices = @transform_0, window_bounds = array<i64: 1, 64, 32>}, {transform_indices = @transform_1, window_bounds = array<i64: 1, 1, 32>}, {transform_indices = @transform_2, window_bounds = array<i64: 1, 32, 256>}, {pipeline_mode = #tpu.pipeline_mode<synchronous>, transform_indices = @transform_3, window_bounds = array<i64: 64, 16>}, {pipeline_mode = #tpu.pipeline_mode<synchronous>, transform_indices = @transform_4, window_bounds = array<i64: 1, 16>}, {pipeline_mode = #tpu.pipeline_mode<synchronous>, transform_indices = @transform_5, window_bounds = array<i64: 16, 64>}, {pipeline_mode = #tpu.pipeline_mode<synchronous>, transform_indices = @transform_6, window_bounds = array<i64: 1, 64>}, {transform_indices = @transform_7, window_bounds = array<i64: 1, 64, 256>}]} {
    %c0 = arith.constant 0 : index
    %c0_0 = arith.constant 0 : index
    %c0_1 = arith.constant 0 : index
    %0 = vector.load %arg2[%c0, %c0_0, %c0_1] : memref<1x64x32xf32, #tpu.memory_space<vmem>>, vector<1x64x32xf32>
    %c0_2 = arith.constant 0 : index
    %c0_3 = arith.constant 0 : index
    %c0_4 = arith.constant 0 : index
    %1 = vector.load %arg3[%c0_2, %c0_3, %c0_4] : memref<1x1x32xf32, #tpu.memory_space<vmem>>, vector<1x1x32xf32>
    %2 = vector.broadcast %1 : vector<1x1x32xf32> to vector<1x64x32xf32>
    %3 = arith.mulf %0, %2 : vector<1x64x32xf32>
    %cst = arith.constant dense<0.000000e+00> : vector<1x64xf32>
    %4 = vector.multi_reduction <add>, %3, %cst [2] : vector<1x64x32xf32> to vector<1x64xf32>
    %c0_5 = arith.constant 0 : index
    %c0_6 = arith.constant 0 : index
    %5 = vector.load %arg5[%c0_5, %c0_6] : memref<64x16xf32, #tpu.memory_space<vmem>>, vector<64x16xf32>
    %cst_7 = arith.constant dense<0.000000e+00> : vector<1x16xf32>
    %6 = tpu.matmul %4, %5, %cst_7 {dimension_numbers = #tpu.dot_dimension_numbers<[1], [0], [0], [1], [0, 0, 1, 1], [], []>} : vector<1x64xf32>, vector<64x16xf32>, vector<1x16xf32> -> vector<1x16xf32>
    %c0_8 = arith.constant 0 : index
    %c0_9 = arith.constant 0 : index
    %7 = vector.load %arg6[%c0_8, %c0_9] : memref<1x16xf32, #tpu.memory_space<vmem>>, vector<1x16xf32>
    %8 = arith.addf %6, %7 : vector<1x16xf32>
    %cst_10 = arith.constant 0.000000e+00 : f32
    %9 = vector.broadcast %cst_10 : f32 to vector<1x16xf32>
    %10 = arith.maximumf %8, %9 : vector<1x16xf32>
    %c0_11 = arith.constant 0 : index
    %c0_12 = arith.constant 0 : index
    %11 = vector.load %arg7[%c0_11, %c0_12] : memref<16x64xf32, #tpu.memory_space<vmem>>, vector<16x64xf32>
    %cst_13 = arith.constant dense<0.000000e+00> : vector<1x64xf32>
    %12 = tpu.matmul %10, %11, %cst_13 {dimension_numbers = #tpu.dot_dimension_numbers<[1], [0], [0], [1], [0, 0, 1, 1], [], []>} : vector<1x16xf32>, vector<16x64xf32>, vector<1x64xf32> -> vector<1x64xf32>
    %c0_14 = arith.constant 0 : index
    %c0_15 = arith.constant 0 : index
    %13 = vector.load %arg8[%c0_14, %c0_15] : memref<1x64xf32, #tpu.memory_space<vmem>>, vector<1x64xf32>
    %14 = arith.addf %12, %13 : vector<1x64xf32>
    %15 = arith.negf %14 : vector<1x64xf32>
    %16 = math.exp %15 : vector<1x64xf32>
    %cst_16 = arith.constant 1.000000e+00 : f32
    %17 = vector.broadcast %cst_16 : f32 to vector<1x64xf32>
    %18 = arith.addf %17, %16 : vector<1x64xf32>
    %19 = arith.divf %17, %18 : vector<1x64xf32>
    %c0_17 = arith.constant 0 : index
    %c0_18 = arith.constant 0 : index
    %c0_19 = arith.constant 0 : index
    %20 = vector.load %arg4[%c0_17, %c0_18, %c0_19] : memref<1x32x256xf32, #tpu.memory_space<vmem>>, vector<1x32x256xf32>
    %cst_20 = arith.constant dense<0.000000e+00> : vector<1x64x256xf32>
    %21 = tpu.matmul %0, %20, %cst_20 {dimension_numbers = #tpu.dot_dimension_numbers<[2], [1], [1], [2], [0, 0, 0, 1, 1, 2], [0], [0]>} : vector<1x64x32xf32>, vector<1x32x256xf32>, vector<1x64x256xf32> -> vector<1x64x256xf32>
    %22 = vector.shape_cast %19 : vector<1x64xf32> to vector<1x64x1xf32>
    %23 = vector.broadcast %22 : vector<1x64x1xf32> to vector<1x64x256xf32>
    %24 = arith.mulf %21, %23 : vector<1x64x256xf32>
    %c0_21 = arith.constant 0 : index
    %c0_22 = arith.constant 0 : index
    %c0_23 = arith.constant 0 : index
    %25 = vector.load %arg9[%c0_21, %c0_22, %c0_23] : memref<1x64x256xf32, #tpu.memory_space<vmem>>, vector<1x64x256xf32>
    tpu.vector_store %arg9[%c0_21, %c0_22, %c0_23], %24 {strides = array<i32>} : memref<1x64x256xf32, #tpu.memory_space<vmem>>, vector<1x64x256xf32>,
    return
  }
  func.func @transform_0(%arg0: i32, %arg1: i32) -> (i32, i32, i32) {
    %c0_i32 = arith.constant 0 : i32
    %c0_i32_0 = arith.constant 0 : i32
    %c0_i32_1 = arith.constant 0 : i32
    return %arg0, %c0_i32, %c0_i32_0 : i32, i32, i32
  }
  func.func @transform_1(%arg0: i32, %arg1: i32) -> (i32, i32, i32) {
    %c0_i32 = arith.constant 0 : i32
    %c0_i32_0 = arith.constant 0 : i32
    %c0_i32_1 = arith.constant 0 : i32
    return %arg0, %c0_i32, %c0_i32_0 : i32, i32, i32
  }
  func.func @transform_2(%arg0: i32, %arg1: i32) -> (i32, i32, i32) {
    %c0_i32 = arith.constant 0 : i32
    %c0_i32_0 = arith.constant 0 : i32
    return %arg0, %c0_i32, %arg1 : i32, i32, i32
  }
  func.func @transform_3(%arg0: i32, %arg1: i32) -> (i32, i32) {
    %c0_i32 = arith.constant 0 : i32
    %c0_i32_0 = arith.constant 0 : i32
    %c0_i32_1 = arith.constant 0 : i32
    return %c0_i32, %c0_i32_0 : i32, i32
  }
  func.func @transform_4(%arg0: i32, %arg1: i32) -> (i32, i32) {
    %c0_i32 = arith.constant 0 : i32
    %c0_i32_0 = arith.constant 0 : i32
    %c0_i32_1 = arith.constant 0 : i32
    return %c0_i32, %c0_i32_0 : i32, i32
  }
  func.func @transform_5(%arg0: i32, %arg1: i32) -> (i32, i32) {
    %c0_i32 = arith.constant 0 : i32
    %c0_i32_0 = arith.constant 0 : i32
    %c0_i32_1 = arith.constant 0 : i32
    return %c0_i32, %c0_i32_0 : i32, i32
  }
  func.func @transform_6(%arg0: i32, %arg1: i32) -> (i32, i32) {
    %c0_i32 = arith.constant 0 : i32
    %c0_i32_0 = arith.constant 0 : i32
    %c0_i32_1 = arith.constant 0 : i32
    return %c0_i32, %c0_i32_0 : i32, i32
  }
  func.func @transform_7(%arg0: i32, %arg1: i32) -> (i32, i32, i32) {
    %c0_i32 = arith.constant 0 : i32
    %c0_i32_0 = arith.constant 0 : i32
    return %arg0, %c0_i32, %arg1 : i32, i32, i32
  }
}

</mosaic_0001>

<llo_original>
// kernel: tpu_custom_call.1
$region0: #{tpu_custom_call.1}
  #allocation0 [shape = 'u32[]', space=smem, size = 0x4, offset = 0x4, fixed_abs, tag = 'smem constant byte address 0x4 - core index']
  #allocation1 [shape = 'u32[144,128]{1,0:T(1,128)}', space=vmem, size = 0x12000, scoped, tag = 'internal scratch']
  %s0 = inlined_call_operand.vmem [shape: f32[2,64,32], index: 0, kind: input, shape index: {}]
  %s1 = inlined_call_operand.vmem [shape: f32[2,1,32], index: 1, kind: input, shape index: {}]
  %s2 = inlined_call_operand.vmem [shape: f32[2,32,256], index: 2, kind: input, shape index: {}]
  %s3 = inlined_call_operand.vmem [shape: f32[64,16], index: 3, kind: input, shape index: {}]
  %s4 = inlined_call_operand.vmem [shape: f32[1,16], index: 4, kind: input, shape index: {}]
  %s5 = inlined_call_operand.vmem [shape: f32[16,64], index: 5, kind: input, shape index: {}]
  %s6 = inlined_call_operand.vmem [shape: f32[1,64], index: 6, kind: input, shape index: {}]
  %s7 = inlined_call_operand.hbm [shape: f32[2,64,256], index: 7, kind: output, shape index: {}]
  %s8 = sld [smem:[#allocation0]]
  $region61: #{tpu_custom_call.1} parent=0
    _
  %s10 = ssub.s32 1, %s8
  %s11 = scalar_select 0, %s10, %s8
  $region1: #{tpu_custom_call.1} parent=0
    #allocation2 [shape = 'u8[131072]{0}', space=vmem, size = 0x20000, scoped, tag = 'output window, operand 0']
    #allocation3 [shape = 's32[2]{0}', space=sflag, size = 0x8, scoped, tag = 'scoped memory for tpu_custom_call.1']
    %12 = vsyncpa [#allocation3], 0
    %s13 = scalar_lea.sflag [#allocation3], 1
    %14 = vsyncpa %s13, 0
    loop: start=0, step=1, limit=4
    $region2: #{tpu_custom_call.1} parent=1 // loop_pre_header
      _
    $region3: #{tpu_custom_call.1} parent=1 // loop_header
      %s16 = sphi 0, %s20
      %p17 = scmp.ge.s32.totalorder %s16, 4
      %s23 = sphi 0, %s35
      %s24 = sphi 0, %s31
      %s25 = sphi 0, %s23
      %s26 = sphi 0, %s24
      %s27 = sphi 0, %s25
      %s28 = sphi 0, %s26
      %s38 = sphi 0, %s40
      %s41 = sphi 0, %s38
      %s42 = sphi 0, %s41
      %s58 = sphi 0, %s42
      %s64 = sphi 0, %s66
      %s67 = sphi 0, %s64
      %s68 = sphi 0, %s67
      %s84 = sphi 0, %s68
      %s92 = sphi 0, %s94
      %s95 = sphi 0, %s92
      %s96 = sphi 0, %s95
      %s112 = sphi 0, %s96
      %s116 = sphi 0, %s116
      %s118 = sphi 0, %s116
      %s119 = sphi 0, %s118
      %s133 = sphi 0, %s119
      %s137 = sphi 0, %s137
      %s139 = sphi 0, %s137
      %s140 = sphi 0, %s139
      %s154 = sphi 0, %s140
      %s158 = sphi 0, %s158
      %s160 = sphi 0, %s158
      %s161 = sphi 0, %s160
      %s175 = sphi 0, %s161
      %s179 = sphi 0, %s179
      %s181 = sphi 0, %s179
      %s182 = sphi 0, %s181
      %s196 = sphi 0, %s182
      %s204 = sphi 0, %s206
      %s207 = sphi 0, %s204
      %s208 = sphi 0, %s207
      %s224 = sphi 0, %s208
    $region4: #{tpu_custom_call.1} parent=1 // loop_header_branch
      %19 = sbr.rel (%p17) target = $region8
    $region5: #{tpu_custom_call.1} parent=1 // loop_body
      %s21 = ssub.s32 %s16, 1
      %s22 = ssub.s32 %s16, 2
      %s29 = sadd.s32 1, %s24
      %p30 = scmp.ge.s32.totalorder %s29, 1
      %s31 = scalar_select %p30, 0, %s29
      %s32 = sadd.s32 1, %s23
      %s33 = scalar_select %p30, %s32, %s23
      %p34 = scmp.ge.s32.totalorder %s33, 2
      %s35 = scalar_select %p34, 0, %s33
      %s36 = ssub.s32 %s23, %s35
      %p37 = scmp.eq.s32.totalorder %s36, 0
      %s39 = sadd.s32 %s38, 1
      %s40 = scalar_select %p37, %s38, %s39
      %p43 = pneg %p37
      %p44 = scmp.eq.s32.totalorder %s16, 1
      %p45 = por %p43, %p44
      %p46 = scmp.ne.s32.totalorder %s38, %s41
      %p47 = scmp.eq.s32.totalorder %s16, 0
      %p48 = por %p46, %p47
      %p49 = scmp.ne.s32.totalorder %s38, %s41
      %p50 = scmp.eq.s32.totalorder %s21, 1
      %p51 = por %p49, %p50
      %p52 = scmp.ne.s32.totalorder %s41, %s42
      %p53 = scmp.eq.s32.totalorder %s21, 0
      %p54 = por %p52, %p53
      %p55 = scmp.ne.s32.totalorder %s41, %s42
      %p56 = scmp.eq.s32.totalorder %s22, 1
      %p57 = por %p55, %p56
      %p59 = scmp.ne.s32.totalorder %s42, %s58
      %p60 = scmp.eq.s32.totalorder %s22, 0
      %p61 = por %p59, %p60
      %s62 = ssub.s32 %s23, %s35
      %p63 = scmp.eq.s32.totalorder %s62, 0
      %s65 = sadd.s32 %s64, 1
      %s66 = scalar_select %p63, %s64, %s65
      %p69 = pneg %p63
      %p70 = scmp.eq.s32.totalorder %s16, 1
      %p71 = por %p69, %p70
      %p72 = scmp.ne.s32.totalorder %s64, %s67
      %p73 = scmp.eq.s32.totalorder %s16, 0
      %p74 = por %p72, %p73
      %p75 = scmp.ne.s32.totalorder %s64, %s67
      %p76 = scmp.eq.s32.totalorder %s21, 1
      %p77 = por %p75, %p76
      %p78 = scmp.ne.s32.totalorder %s67, %s68
      %p79 = scmp.eq.s32.totalorder %s21, 0
      %p80 = por %p78, %p79
      %p81 = scmp.ne.s32.totalorder %s67, %s68
      %p82 = scmp.eq.s32.totalorder %s22, 1
      %p83 = por %p81, %p82
      %p85 = scmp.ne.s32.totalorder %s68, %s84
      %p86 = scmp.eq.s32.totalorder %s22, 0
      %p87 = por %p85, %p86
      %s88 = ssub.s32 %s23, %s35
      %s89 = ssub.s32 %s24, %s31
      %s90 = sor.u32 %s88, %s89
      %p91 = scmp.eq.s32.totalorder %s90, 0
      %s93 = sadd.s32 %s92, 1
      %s94 = scalar_select %p91, %s92, %s93
      %p97 = pneg %p91
      %p98 = scmp.eq.s32.totalorder %s16, 1
      %p99 = por %p97, %p98
      %p100 = scmp.ne.s32.totalorder %s92, %s95
      %p101 = scmp.eq.s32.totalorder %s16, 0
      %p102 = por %p100, %p101
      %p103 = scmp.ne.s32.totalorder %s92, %s95
      %p104 = scmp.eq.s32.totalorder %s21, 1
      %p105 = por %p103, %p104
      %p106 = scmp.ne.s32.totalorder %s95, %s96
      %p107 = scmp.eq.s32.totalorder %s21, 0
      %p108 = por %p106, %p107
      %p109 = scmp.ne.s32.totalorder %s95, %s96
      %p110 = scmp.eq.s32.totalorder %s22, 1
      %p111 = por %p109, %p110
      %p113 = scmp.ne.s32.totalorder %s96, %s112
      %p114 = scmp.eq.s32.totalorder %s22, 0
      %p115 = por %p113, %p114
      %s117 = sadd.s32 %s116, 1
      %p120 = scmp.eq.s32.totalorder %s16, 1
      %p121 = scmp.ne.s32.totalorder %s116, %s118
      %p122 = scmp.eq.s32.totalorder %s16, 0
      %p123 = por %p121, %p122
      %p124 = scmp.ne.s32.totalorder %s116, %s118
      %p125 = scmp.eq.s32.totalorder %s21, 1
      %p126 = por %p124, %p125
      %p127 = scmp.ne.s32.totalorder %s118, %s119
      %p128 = scmp.eq.s32.totalorder %s21, 0
      %p129 = por %p127, %p128
      %p130 = scmp.ne.s32.totalorder %s118, %s119
      %p131 = scmp.eq.s32.totalorder %s22, 1
      %p132 = por %p130, %p131
      %p134 = scmp.ne.s32.totalorder %s119, %s133
      %p135 = scmp.eq.s32.totalorder %s22, 0
      %p136 = por %p134, %p135
      %s138 = sadd.s32 %s137, 1
      %p141 = scmp.eq.s32.totalorder %s16, 1
      %p142 = scmp.ne.s32.totalorder %s137, %s139
      %p143 = scmp.eq.s32.totalorder %s16, 0
      %p144 = por %p142, %p143
      %p145 = scmp.ne.s32.totalorder %s137, %s139
      %p146 = scmp.eq.s32.totalorder %s21, 1
      %p147 = por %p145, %p146
      %p148 = scmp.ne.s32.totalorder %s139, %s140
      %p149 = scmp.eq.s32.totalorder %s21, 0
      %p150 = por %p148, %p149
      %p151 = scmp.ne.s32.totalorder %s139, %s140
      %p152 = scmp.eq.s32.totalorder %s22, 1
      %p153 = por %p151, %p152
      %p155 = scmp.ne.s32.totalorder %s140, %s154
      %p156 = scmp.eq.s32.totalorder %s22, 0
      %p157 = por %p155, %p156
      %s159 = sadd.s32 %s158, 1
      %p162 = scmp.eq.s32.totalorder %s16, 1
      %p163 = scmp.ne.s32.totalorder %s158, %s160
      %p164 = scmp.eq.s32.totalorder %s16, 0
      %p165 = por %p163, %p164
      %p166 = scmp.ne.s32.totalorder %s158, %s160
      %p167 = scmp.eq.s32.totalorder %s21, 1
      %p168 = por %p166, %p167
      %p169 = scmp.ne.s32.totalorder %s160, %s161
      %p170 = scmp.eq.s32.totalorder %s21, 0
      %p171 = por %p169, %p170
      %p172 = scmp.ne.s32.totalorder %s160, %s161
      %p173 = scmp.eq.s32.totalorder %s22, 1
      %p174 = por %p172, %p173
      %p176 = scmp.ne.s32.totalorder %s161, %s175
      %p177 = scmp.eq.s32.totalorder %s22, 0
      %p178 = por %p176, %p177
      %s180 = sadd.s32 %s179, 1
      %p183 = scmp.eq.s32.totalorder %s16, 1
      %p184 = scmp.ne.s32.totalorder %s179, %s181
      %p185 = scmp.eq.s32.totalorder %s16, 0
      %p186 = por %p184, %p185
      %p187 = scmp.ne.s32.totalorder %s179, %s181
      %p188 = scmp.eq.s32.totalorder %s21, 1
      %p189 = por %p187, %p188
      %p190 = scmp.ne.s32.totalorder %s181, %s182
      %p191 = scmp.eq.s32.totalorder %s21, 0
      %p192 = por %p190, %p191
      %p193 = scmp.ne.s32.totalorder %s181, %s182
      %p194 = scmp.eq.s32.totalorder %s22, 1
      %p195 = por %p193, %p194
      %p197 = scmp.ne.s32.totalorder %s182, %s196
      %p198 = scmp.eq.s32.totalorder %s22, 0
      %p199 = por %p197, %p198
      %s200 = ssub.s32 %s23, %s35
      %s201 = ssub.s32 %s24, %s31
      %s202 = sor.u32 %s200, %s201
      %p203 = scmp.eq.s32.totalorder %s202, 0
      %s205 = sadd.s32 %s204, 1
      %s206 = scalar_select %p203, %s204, %s205
      %p209 = pneg %p203
      %p210 = scmp.eq.s32.totalorder %s16, 1
      %p211 = por %p209, %p210
      %p212 = scmp.ne.s32.totalorder %s204, %s207
      %p213 = scmp.eq.s32.totalorder %s16, 0
      %p214 = por %p212, %p213
      %p215 = scmp.ne.s32.totalorder %s204, %s207
      %p216 = scmp.eq.s32.totalorder %s21, 1
      %p217 = por %p215, %p216
      %p218 = scmp.ne.s32.totalorder %s207, %s208
      %p219 = scmp.eq.s32.totalorder %s21, 0
      %p220 = por %p218, %p219
      %p221 = scmp.ne.s32.totalorder %s207, %s208
      %p222 = scmp.eq.s32.totalorder %s22, 1
      %p223 = por %p221, %p222
      %p225 = scmp.ne.s32.totalorder %s208, %s224
      %p226 = scmp.eq.s32.totalorder %s22, 0
      %p227 = por %p225, %p226
      %p228 = scmp.le.s32.totalorder 1, %s16
      %p229 = scmp.lt.s32.totalorder %s16, 3
      %p230 = pnand %p228, %p229
      %p231 = pneg %p230
      // Predicated region
      $region9: #{tpu_custom_call.1} parent=5 // pred_check
        _
      $region10: #{tpu_custom_call.1} parent=5 // pred_check_branch
        %233 = sbr.rel (%p230) target = $region12
      $region11: #{tpu_custom_call.1} parent=5 // pred_region
        %s234 = ssub.s32 %s16, 1
        // Predicated region
        $region13: #{tpu_custom_call.1} parent=11 // pred_check
          %p235 = pneg %p129
        $region14: #{tpu_custom_call.1} parent=11 // pred_check_branch
          %237 = sbr.rel (%p235) target = $region16
        $region15: #{tpu_custom_call.1} parent=11 // pred_region
          _
        $region16: #{tpu_custom_call.1} parent=11 // pred_fallthru
          _
        // Predicated region
        $region17: #{tpu_custom_call.1} parent=11 // pred_check
          %p238 = pneg %p150
        $region18: #{tpu_custom_call.1} parent=11 // pred_check_branch
          %240 = sbr.rel (%p238) target = $region20
        $region19: #{tpu_custom_call.1} parent=11 // pred_region
          _
        $region20: #{tpu_custom_call.1} parent=11 // pred_fallthru
          _
        // Predicated region
        $region21: #{tpu_custom_call.1} parent=11 // pred_check
          %p241 = pneg %p171
        $region22: #{tpu_custom_call.1} parent=11 // pred_check_branch
          %243 = sbr.rel (%p241) target = $region24
        $region23: #{tpu_custom_call.1} parent=11 // pred_region
          _
        $region24: #{tpu_custom_call.1} parent=11 // pred_fallthru
          _
        // Predicated region
        $region25: #{tpu_custom_call.1} parent=11 // pred_check
          %p244 = pneg %p192
        $region26: #{tpu_custom_call.1} parent=11 // pred_check_branch
          %246 = sbr.rel (%p244) target = $region28
        $region27: #{tpu_custom_call.1} parent=11 // pred_region
          _
        $region28: #{tpu_custom_call.1} parent=11 // pred_fallthru
          _
      $region12: #{tpu_custom_call.1} parent=5 // pred_fallthru
        _
      %p247 = scmp.lt.s32.totalorder %s16, 2
      // Predicated region
      $region29: #{tpu_custom_call.1} parent=5 // pred_check
        %p248 = pneg %p247
      $region30: #{tpu_custom_call.1} parent=5 // pred_check_branch
        %250 = sbr.rel (%p248) target = $region32
      $region31: #{tpu_custom_call.1} parent=5 // pred_region
        // Predicated region
        $region33: #{tpu_custom_call.1} parent=31 // pred_check
          %p251 = pneg %p48
        $region34: #{tpu_custom_call.1} parent=31 // pred_check_branch
          %253 = sbr.rel (%p251) target = $region36
        $region35: #{tpu_custom_call.1} parent=31 // pred_region
          %p254 = scmp.lt.s32.totalorder %s23, 1
          %s255 = scalar_select %p254, %s23, 1
          %s256 = smul.addr %s255, 8
          %s257 = smul.addr %s256, 8
          %s258 = scalar_lea.vmem %s0, %s257
        $region36: #{tpu_custom_call.1} parent=31 // pred_fallthru
          _
        // Predicated region
        $region37: #{tpu_custom_call.1} parent=31 // pred_check
          %p259 = pneg %p74
        $region38: #{tpu_custom_call.1} parent=31 // pred_check_branch
          %261 = sbr.rel (%p259) target = $region40
        $region39: #{tpu_custom_call.1} parent=31 // pred_region
          %p262 = scmp.lt.s32.totalorder %s23, 1
          %s263 = scalar_select %p262, %s23, 1
          %s264 = scalar_lea.vmem %s1, %s263
        $region40: #{tpu_custom_call.1} parent=31 // pred_fallthru
          _
        // Predicated region
        $region41: #{tpu_custom_call.1} parent=31 // pred_check
          %p265 = pneg %p102
        $region42: #{tpu_custom_call.1} parent=31 // pred_check_branch
          %267 = sbr.rel (%p265) target = $region44
        $region43: #{tpu_custom_call.1} parent=31 // pred_region
          %s268 = smul.u32 2, %s24
          %p269 = scmp.lt.s32.totalorder %s23, 1
          %s270 = scalar_select %p269, %s23, 1
          %p271 = scmp.lt.s32.totalorder %s268, 1
          %s272 = scalar_select %p271, %s268, 1
          %s273 = smul.addr %s270, 8
          %s274 = sadd.s32 %s272, %s273
          %s275 = smul.addr %s274, 8
          %s276 = scalar_lea.vmem %s2, %s275
          %s277 = smul.u32 2, %s24
        $region44: #{tpu_custom_call.1} parent=31 // pred_fallthru
          _
      $region32: #{tpu_custom_call.1} parent=5 // pred_fallthru
        _
      %p278 = scmp.le.s32.totalorder 1, %s16
      %p279 = scmp.lt.s32.totalorder %s16, 3
      %p280 = pnand %p278, %p279
      %p281 = pneg %p280
      // Predicated region
      $region45: #{tpu_custom_call.1} parent=5 // pred_check
        _
      $region46: #{tpu_custom_call.1} parent=5 // pred_check_branch
        %283 = sbr.rel (%p280) target = $region48
      $region47: #{tpu_custom_call.1} parent=5 // pred_region
        %s284 = ssub.s32 %s16, 1
        %p285 = scmp.lt.s32.totalorder %s25, 1
        %s286 = scalar_select %p285, %s25, 1
        %s287 = smul.addr %s286, 8
        %s288 = smul.addr %s287, 8
        %s289 = scalar_lea.vmem %s0, %s288
        %p290 = pneg %p54
        %p291 = pneg %p51
        %p292 = scmp.lt.s32.totalorder %s25, 1
        %s293 = scalar_select %p292, %s25, 1
        %s294 = scalar_lea.vmem %s1, %s293
        %p295 = pneg %p80
        %p296 = pneg %p77
        %s297 = smul.u32 2, %s26
        %p298 = scmp.lt.s32.totalorder %s25, 1
        %s299 = scalar_select %p298, %s25, 1
        %p300 = scmp.lt.s32.totalorder %s297, 1
        %s301 = scalar_select %p300, %s297, 1
        %s302 = smul.addr %s299, 8
        %s303 = sadd.s32 %s301, %s302
        %s304 = smul.addr %s303, 8
        %s305 = scalar_lea.vmem %s2, %s304
        %p306 = pneg %p108
        %p307 = pneg %p105
        %p308 = pneg %p129
        %p309 = pneg %p126
        %p310 = pneg %p150
        %p311 = pneg %p147
        %p312 = pneg %p171
        %p313 = pneg %p168
        %p314 = pneg %p192
        %p315 = pneg %p189
        %p316 = pneg %p220
        %p317 = pneg %p217
        %s318 = sand.u32 %s207, 1
        %s319 = scalar_lea.sflag [#allocation3], %s318
        %s320 = sand.u32 %s207, 1
        %s321 = smul.addr %s320, 128
        %s322 = scalar_lea.vmem [#allocation2], %s321
        %p323 = scmp.lt.s32.totalorder %s25, 1
        %s324 = scalar_select %p323, %s25, 1
        %s325 = smul.addr %s324, 8
        %s326 = smul.addr %s325, 8
        %s327 = scalar_lea.vmem %s0, %s326
        %p328 = scmp.lt.s32.totalorder %s25, 1
        %s329 = scalar_select %p328, %s25, 1
        %s330 = scalar_lea.vmem %s1, %s329
        %s331 = smul.u32 2, %s26
        %p332 = scmp.lt.s32.totalorder %s25, 1
        %s333 = scalar_select %p332, %s25, 1
        %p334 = scmp.lt.s32.totalorder %s331, 1
        %s335 = scalar_select %p334, %s331, 1
        %s336 = smul.addr %s333, 8
        %s337 = sadd.s32 %s335, %s336
        %s338 = smul.addr %s337, 8
        %s339 = scalar_lea.vmem %s2, %s338
        %s340 = smul.u32 2, %s26
        %s341 = smul.u32 2, %s26
        %v342 = vld [vmem:[%s327] sm:$0xff]
        %v343 = vld [vmem:[%s327 + $0x8] sm:$0xff]
        %v344 = vld [vmem:[%s327 + $0x10] sm:$0xff]
        %v345 = vld [vmem:[%s327 + $0x18] sm:$0xff]
        %v346 = vld [vmem:[%s327 + $0x20] sm:$0xff]
        %v347 = vld [vmem:[%s327 + $0x28] sm:$0xff]
        %v348 = vld [vmem:[%s327 + $0x30] sm:$0xff]
        %v349 = vld [vmem:[%s327 + $0x38] sm:$0xff]
        %v350 = vld [vmem:[%s330] sm:$0x1]
        %v352 = vlaneseq
        %v353 = vshrl.u32 %v352, 7
        %v354 = vsub.s32 0, %v353
        %v355 = vrot.slane %v350, %v354
        %v357 = vmul.f32 %v342, %v355
        %v358 = vmul.f32 %v343, %v355
        %v359 = vmul.f32 %v344, %v355
        %v360 = vmul.f32 %v345, %v355
        %v361 = vmul.f32 %v346, %v355
        %v362 = vmul.f32 %v347, %v355
        %v363 = vmul.f32 %v348, %v355
        %v364 = vmul.f32 %v349, %v355
        %vm365 = vcmask 261120
        %v366 = vsel %vm365, %v357, 0.0
        %367 = vadd.xlane.f32.xlu0 %v366
        %v368 = vpop.xlane.xlu0 %367
        %v369 = vsel %vm365, %v358, 0.0
        %370 = vadd.xlane.f32.xlu0 %v369
        %v371 = vpop.xlane.xlu0 %370
        %v372 = vsel %vm365, %v359, 0.0
        %373 = vadd.xlane.f32.xlu0 %v372
        %v374 = vpop.xlane.xlu0 %373
        %v375 = vsel %vm365, %v360, 0.0
        %376 = vadd.xlane.f32.xlu0 %v375
        %v377 = vpop.xlane.xlu0 %376
        %v378 = vsel %vm365, %v361, 0.0
        %379 = vadd.xlane.f32.xlu0 %v378
        %v380 = vpop.xlane.xlu0 %379
        %v381 = vsel %vm365, %v362, 0.0
        %382 = vadd.xlane.f32.xlu0 %v381
        %v383 = vpop.xlane.xlu0 %382
        %v384 = vsel %vm365, %v363, 0.0
        %385 = vadd.xlane.f32.xlu0 %v384
        %v386 = vpop.xlane.xlu0 %385
        %v387 = vsel %vm365, %v364, 0.0
        %388 = vadd.xlane.f32.xlu0 %v387
        %v389 = vpop.xlane.xlu0 %388
        %v390 = vld [vmem:[%s3] sm:$0xff]
        %v391 = vld [vmem:[%s3 + $0x8] sm:$0xff]
        %v392 = vld [vmem:[%s3 + $0x10] sm:$0xff]
        %v393 = vld [vmem:[%s3 + $0x18] sm:$0xff]
        %v394 = vld [vmem:[%s3 + $0x20] sm:$0xff]
        %v395 = vld [vmem:[%s3 + $0x28] sm:$0xff]
        %v396 = vld [vmem:[%s3 + $0x30] sm:$0xff]
        %v397 = vld [vmem:[%s3 + $0x38] sm:$0xff]
        %v398 = vld [vmem:[%s4] sm:$0x1]
        %v407 = vlaneseq
        %v408 = vand.u32 %v407, 127
        %v409 = vlaneseq
        %v410 = vshrl.u32 %v409, 7
        %v411 = vsub.s32 %v408, %v410
        %v412 = vrot.slane %v368, %v411
        %v413 = vadd.s32 %v408, 4294967288
        %v414 = vlaneseq
        %v415 = vshrl.u32 %v414, 7
        %v416 = vsub.s32 %v413, %v415
        %v417 = vrot.slane %v371, %v416
        %vm418 = vcmask 130112
        %v419 = vsel %vm418, %v417, %v412
        %v420 = vadd.s32 %v408, 4294967280
        %v421 = vlaneseq
        %v422 = vshrl.u32 %v421, 7
        %v423 = vsub.s32 %v420, %v422
        %v424 = vrot.slane %v374, %v423
        %vm425 = vcmask 195712
        %v426 = vsel %vm425, %v424, %v419
        %v427 = vadd.s32 %v408, 4294967272
        %v428 = vlaneseq
        %v429 = vshrl.u32 %v428, 7
        %v430 = vsub.s32 %v427, %v429
        %v431 = vrot.slane %v377, %v430
        %vm432 = vcmask 261312
        %v433 = vsel %vm432, %v431, %v426
        %v434 = vadd.s32 %v408, 4294967264
        %v435 = vlaneseq
        %v436 = vshrl.u32 %v435, 7
        %v437 = vsub.s32 %v434, %v436
        %v438 = vrot.slane %v380, %v437
        %vm439 = vcmask 326912
        %v440 = vsel %vm439, %v438, %v433
        %v441 = vadd.s32 %v408, 4294967256
        %v442 = vlaneseq
        %v443 = vshrl.u32 %v442, 7
        %v444 = vsub.s32 %v441, %v443
        %v445 = vrot.slane %v383, %v444
        %vm446 = vcmask 392512
        %v447 = vsel %vm446, %v445, %v440
        %v448 = vadd.s32 %v408, 4294967248
        %v449 = vlaneseq
        %v450 = vshrl.u32 %v449, 7
        %v451 = vsub.s32 %v448, %v450
        %v452 = vrot.slane %v386, %v451
        %vm453 = vcmask 458112
        %v454 = vsel %vm453, %v452, %v447
        %v455 = vadd.s32 %v408, 4294967240
        %v456 = vlaneseq
        %v457 = vshrl.u32 %v456, 7
        %v458 = vsub.s32 %v455, %v457
        %v459 = vrot.slane %v389, %v458
        %vm460 = vcmask 523712
        %v461 = vsel %vm460, %v459, %v454
        %vm462 = vcmask 523264
        %v463 = vsel %vm462, %v461, 0
        %465 = vmatprep.subr.mxu0 0.0
        %466 = vmatpush1.msra.mxu0 0.0
        %467 = vmatprep.subr.mxu0 0.0
        %468 = vmatpush1.msra.mxu0 0.0
        %469 = vmatprep.subr.mxu0 0.0
        %470 = vmatpush1.msra.mxu0 0.0
        %471 = vmatprep.subr.mxu0 0.0
        %472 = vmatpush1.msra.mxu0 0.0
        %473 = vmatprep.subr.mxu0 0.0
        %474 = vmatpush1.msra.mxu0 0.0
        %475 = vmatprep.subr.mxu0 0.0
        %476 = vmatpush1.msra.mxu0 0.0
        %477 = vmatprep.subr.mxu0 0.0
        %478 = vmatpush1.msra.mxu0 0.0
        %479 = vmatprep.subr.mxu0 0.0
        %480 = vmatpush1.msra.mxu0 0.0
        %481 = vmatprep.subr.mxu0 0.0
        %482 = vmatpush1.msra.mxu0 %v397
        %483 = vmatprep.subr.mxu0 0.0
        %484 = vmatpush1.msra.mxu0 %v396
        %485 = vmatprep.subr.mxu0 0.0
        %486 = vmatpush1.msra.mxu0 %v395
        %487 = vmatprep.subr.mxu0 0.0
        %488 = vmatpush1.msra.mxu0 %v394
        %489 = vmatprep.subr.mxu0 0.0
        %490 = vmatpush1.msra.mxu0 %v393
        %491 = vmatprep.subr.mxu0 0.0
        %492 = vmatpush1.msra.mxu0 %v392
        %493 = vmatprep.subr.mxu0 0.0
        %494 = vmatpush1.msra.mxu0 %v391
        %495 = vmatprep.subr.mxu0 0.0
        %496 = vmatpush1.msra.mxu0 %v390
        %497 = vmatprep.subr.mxu0 0.0
        %498 = vmatpush2.msra.mxu0 0.0
        %499 = vmatprep.subr.mxu0 0.0
        %500 = vmatpush2.msra.mxu0 0.0
        %501 = vmatprep.subr.mxu0 0.0
        %502 = vmatpush2.msra.mxu0 0.0
        %503 = vmatprep.subr.mxu0 0.0
        %504 = vmatpush2.msra.mxu0 0.0
        %505 = vmatprep.subr.mxu0 0.0
        %506 = vmatpush2.msra.mxu0 0.0
        %507 = vmatprep.subr.mxu0 0.0
        %508 = vmatpush2.msra.mxu0 0.0
        %509 = vmatprep.subr.mxu0 0.0
        %510 = vmatpush2.msra.mxu0 0.0
        %511 = vmatprep.subr.mxu0 0.0
        %512 = vmatpush2.msra.mxu0 0.0
        %513 = vmatprep.subr.mxu0 0.0
        %514 = vmatpush2.msra.mxu0 0.0
        %515 = vmatprep.subr.mxu0 0.0
        %516 = vmatpush2.msra.mxu0 0.0
        %517 = vmatprep.subr.mxu0 0.0
        %518 = vmatpush2.msra.mxu0 0.0
        %519 = vmatprep.subr.mxu0 0.0
        %520 = vmatpush2.msra.mxu0 0.0
        %521 = vmatprep.subr.mxu0 0.0
        %522 = vmatpush2.msra.mxu0 0.0
        %523 = vmatprep.subr.mxu0 0.0
        %524 = vmatpush2.msra.mxu0 0.0
        %525 = vmatprep.subr.mxu0 0.0
        %526 = vmatpush2.msra.mxu0 0.0
        %527 = vmatprep.subr.mxu0 0.0
        %528 = vmatpush2.msra.mxu0 0.0
        %529 = vmatprep.mubr.f32.mxu0 0.0
        %530 = vmatmul.mubr.f32.gmra.mxu0 %v463
        %v531 = vpop.f32.mrf.mxu0
        %v532 = vadd.f32 %v398, %v531
        %v533 = vpop.f32.mrf.mxu0
        %534 = vdwg.mxu0
        %v535 = vmax.f32 %v532, 0.0
        %v536 = vld [vmem:[%s5] sm:$0xff]
        %v537 = vld [vmem:[%s5 + $0x8] sm:$0xff]
        %v538 = vld [vmem:[%s6] sm:$0x1]
        %vm539 = vcmask 130048
        %v541 = vsel %vm539, %v535, 0
        %543 = vmatprep.subr.mxu0 0.0
        %544 = vmatpush1.msra.mxu0 0.0
        %545 = vmatprep.subr.mxu0 0.0
        %546 = vmatpush1.msra.mxu0 0.0
        %547 = vmatprep.subr.mxu0 0.0
        %548 = vmatpush1.msra.mxu0 0.0
        %549 = vmatprep.subr.mxu0 0.0
        %550 = vmatpush1.msra.mxu0 0.0
        %551 = vmatprep.subr.mxu0 0.0
        %552 = vmatpush1.msra.mxu0 0.0
        %553 = vmatprep.subr.mxu0 0.0
        %554 = vmatpush1.msra.mxu0 0.0
        %555 = vmatprep.subr.mxu0 0.0
        %556 = vmatpush1.msra.mxu0 0.0
        %557 = vmatprep.subr.mxu0 0.0
        %558 = vmatpush1.msra.mxu0 0.0
        %559 = vmatprep.subr.mxu0 0.0
        %560 = vmatpush1.msra.mxu0 0.0
        %561 = vmatprep.subr.mxu0 0.0
        %562 = vmatpush1.msra.mxu0 0.0
        %563 = vmatprep.subr.mxu0 0.0
        %564 = vmatpush1.msra.mxu0 0.0
        %565 = vmatprep.subr.mxu0 0.0
        %566 = vmatpush1.msra.mxu0 0.0
        %567 = vmatprep.subr.mxu0 0.0
        %568 = vmatpush1.msra.mxu0 0.0
        %569 = vmatprep.subr.mxu0 0.0
        %570 = vmatpush1.msra.mxu0 0.0
        %571 = vmatprep.subr.mxu0 0.0
        %572 = vmatpush1.msra.mxu0 %v537
        %573 = vmatprep.subr.mxu0 0.0
        %574 = vmatpush1.msra.mxu0 %v536
        %575 = vmatprep.subr.mxu0 0.0
        %576 = vmatpush2.msra.mxu0 0.0
        %577 = vmatprep.subr.mxu0 0.0
        %578 = vmatpush2.msra.mxu0 0.0
        %579 = vmatprep.subr.mxu0 0.0
        %580 = vmatpush2.msra.mxu0 0.0
        %581 = vmatprep.subr.mxu0 0.0
        %582 = vmatpush2.msra.mxu0 0.0
        %583 = vmatprep.subr.mxu0 0.0
        %584 = vmatpush2.msra.mxu0 0.0
        %585 = vmatprep.subr.mxu0 0.0
        %586 = vmatpush2.msra.mxu0 0.0
        %587 = vmatprep.subr.mxu0 0.0
        %588 = vmatpush2.msra.mxu0 0.0
        %589 = vmatprep.subr.mxu0 0.0
        %590 = vmatpush2.msra.mxu0 0.0
        %591 = vmatprep.subr.mxu0 0.0
        %592 = vmatpush2.msra.mxu0 0.0
        %593 = vmatprep.subr.mxu0 0.0
        %594 = vmatpush2.msra.mxu0 0.0
        %595 = vmatprep.subr.mxu0 0.0
        %596 = vmatpush2.msra.mxu0 0.0
        %597 = vmatprep.subr.mxu0 0.0
        %598 = vmatpush2.msra.mxu0 0.0
        %599 = vmatprep.subr.mxu0 0.0
        %600 = vmatpush2.msra.mxu0 0.0
        %601 = vmatprep.subr.mxu0 0.0
        %602 = vmatpush2.msra.mxu0 0.0
        %603 = vmatprep.subr.mxu0 0.0
        %604 = vmatpush2.msra.mxu0 0.0
        %605 = vmatprep.subr.mxu0 0.0
        %606 = vmatpush2.msra.mxu0 0.0
        %607 = vmatprep.mubr.f32.mxu0 0.0
        %608 = vmatmul.mubr.f32.gmra.mxu0 %v541
        %v609 = vpop.f32.mrf.mxu0
        %v610 = vadd.f32 %v538, %v609
        %v611 = vpop.f32.mrf.mxu0
        %612 = vdwg.mxu0
        %v613 = vxor.u32 %v610, 2147483648
        %v614 = vmul.f32 %v613, 1.442695
        %v615 = vpow.pop %v614
        %v616 = vadd.f32 %v615, 1.0
        %v617 = vrcp.pop %v616
        %v618 = vmul.f32 1.0, %v617
        %v619 = vld [vmem:[%s339] sm:$0xff]
        %v620 = vld [vmem:[%s339 + $0x8] sm:$0xff]
        %v621 = vld [vmem:[%s339 + $0x10] sm:$0xff]
        %v622 = vld [vmem:[%s339 + $0x18] sm:$0xff]
        %v623 = vld [vmem:[%s339 + $0x20] sm:$0xff]
        %v624 = vld [vmem:[%s339 + $0x28] sm:$0xff]
        %v625 = vld [vmem:[%s339 + $0x30] sm:$0xff]
        %v626 = vld [vmem:[%s339 + $0x38] sm:$0xff]
        %v628 = vsel %vm365, %v342, 0
        %v631 = vsel %vm365, %v343, 0
        %v634 = vsel %vm365, %v344, 0
        %v637 = vsel %vm365, %v345, 0
        %v640 = vsel %vm365, %v346, 0
        %v643 = vsel %vm365, %v347, 0
        %v646 = vsel %vm365, %v348, 0
        %v649 = vsel %vm365, %v349, 0
        %651 = vmatprep.subr.mxu0 0.0
        %652 = vmatpush1.msra.mxu0 0.0
        %653 = vmatprep.subr.mxu0 0.0
        %654 = vmatpush1.msra.mxu0 0.0
        %655 = vmatprep.subr.mxu0 0.0
        %656 = vmatpush1.msra.mxu0 0.0
        %657 = vmatprep.subr.mxu0 0.0
        %658 = vmatpush1.msra.mxu0 0.0
        %659 = vmatprep.subr.mxu0 0.0
        %660 = vmatpush1.msra.mxu0 0.0
        %661 = vmatprep.subr.mxu0 0.0
        %662 = vmatpush1.msra.mxu0 0.0
        %663 = vmatprep.subr.mxu0 0.0
        %664 = vmatpush1.msra.mxu0 0.0
        %665 = vmatprep.subr.mxu0 0.0
        %666 = vmatpush1.msra.mxu0 0.0
        %667 = vmatprep.subr.mxu0 0.0
        %668 = vmatpush1.msra.mxu0 0.0
        %669 = vmatprep.subr.mxu0 0.0
        %670 = vmatpush1.msra.mxu0 0.0
        %671 = vmatprep.subr.mxu0 0.0
        %672 = vmatpush1.msra.mxu0 0.0
        %673 = vmatprep.subr.mxu0 0.0
        %674 = vmatpush1.msra.mxu0 0.0
        %675 = vmatprep.subr.mxu0 %v626
        %676 = vmatpush1.msra.mxu0 %v625
        %677 = vmatprep.subr.mxu0 %v624
        %678 = vmatpush1.msra.mxu0 %v623
        %679 = vmatprep.subr.mxu0 %v622
        %680 = vmatpush1.msra.mxu0 %v621
        %681 = vmatprep.subr.mxu0 %v620
        %682 = vmatpush1.msra.mxu0 %v619
        %683 = vmatprep.subr.mxu0 0.0
        %684 = vmatpush2.msra.mxu0 0.0
        %685 = vmatprep.subr.mxu0 0.0
        %686 = vmatpush2.msra.mxu0 0.0
        %687 = vmatprep.subr.mxu0 0.0
        %688 = vmatpush2.msra.mxu0 0.0
        %689 = vmatprep.subr.mxu0 0.0
        %690 = vmatpush2.msra.mxu0 0.0
        %691 = vmatprep.subr.mxu0 0.0
        %692 = vmatpush2.msra.mxu0 0.0
        %693 = vmatprep.subr.mxu0 0.0
        %694 = vmatpush2.msra.mxu0 0.0
        %695 = vmatprep.subr.mxu0 0.0
        %696 = vmatpush2.msra.mxu0 0.0
        %697 = vmatprep.subr.mxu0 0.0
        %698 = vmatpush2.msra.mxu0 0.0
        %699 = vmatprep.subr.mxu0 0.0
        %700 = vmatpush2.msra.mxu0 0.0
        %701 = vmatprep.subr.mxu0 0.0
        %702 = vmatpush2.msra.mxu0 0.0
        %703 = vmatprep.subr.mxu0 0.0
        %704 = vmatpush2.msra.mxu0 0.0
        %705 = vmatprep.subr.mxu0 0.0
        %706 = vmatpush2.msra.mxu0 0.0
        %707 = vmatprep.subr.mxu0 0.0
        %708 = vmatpush2.msra.mxu0 0.0
        %709 = vmatprep.subr.mxu0 0.0
        %710 = vmatpush2.msra.mxu0 0.0
        %711 = vmatprep.subr.mxu0 0.0
        %712 = vmatpush2.msra.mxu0 0.0
        %713 = vmatprep.subr.mxu0 0.0
        %714 = vmatpush2.msra.mxu0 0.0
        %715 = vmatprep.mubr.f32.mxu0 0.0
        %716 = vmatmul.mubr.f32.gmra.mxu0 %v628
        %v717 = vpop.f32.mrf.mxu0
        %v718 = vadd.f32 0.0, %v717
        %v719 = vpop.f32.mrf.mxu0
        %v720 = vadd.f32 0.0, %v719
        %721 = vmatprep.mubr.f32.mxu0 0.0
        %722 = vmatmul.mubr.f32.gmra.mxu0 %v631
        %v723 = vpop.f32.mrf.mxu0
        %v724 = vadd.f32 0.0, %v723
        %v725 = vpop.f32.mrf.mxu0
        %v726 = vadd.f32 0.0, %v725
        %727 = vmatprep.mubr.f32.mxu0 0.0
        %728 = vmatmul.mubr.f32.gmra.mxu0 %v634
        %v729 = vpop.f32.mrf.mxu0
        %v730 = vadd.f32 0.0, %v729
        %v731 = vpop.f32.mrf.mxu0
        %v732 = vadd.f32 0.0, %v731
        %733 = vmatprep.mubr.f32.mxu0 0.0
        %734 = vmatmul.mubr.f32.gmra.mxu0 %v637
        %v735 = vpop.f32.mrf.mxu0
        %v736 = vadd.f32 0.0, %v735
        %v737 = vpop.f32.mrf.mxu0
        %v738 = vadd.f32 0.0, %v737
        %739 = vmatprep.mubr.f32.mxu0 0.0
        %740 = vmatmul.mubr.f32.gmra.mxu0 %v640
        %v741 = vpop.f32.mrf.mxu0
        %v742 = vadd.f32 0.0, %v741
        %v743 = vpop.f32.mrf.mxu0
        %v744 = vadd.f32 0.0, %v743
        %745 = vmatprep.mubr.f32.mxu0 0.0
        %746 = vmatmul.mubr.f32.gmra.mxu0 %v643
        %v747 = vpop.f32.mrf.mxu0
        %v748 = vadd.f32 0.0, %v747
        %v749 = vpop.f32.mrf.mxu0
        %v750 = vadd.f32 0.0, %v749
        %751 = vmatprep.mubr.f32.mxu0 0.0
        %752 = vmatmul.mubr.f32.gmra.mxu0 %v646
        %v753 = vpop.f32.mrf.mxu0
        %v754 = vadd.f32 0.0, %v753
        %v755 = vpop.f32.mrf.mxu0
        %v756 = vadd.f32 0.0, %v755
        %757 = vmatprep.mubr.f32.mxu0 0.0
        %758 = vmatmul.mubr.f32.gmra.mxu0 %v649
        %v759 = vpop.f32.mrf.mxu0
        %v760 = vadd.f32 0.0, %v759
        %v761 = vpop.f32.mrf.mxu0
        %v762 = vadd.f32 0.0, %v761
        %763 = vdwg.mxu0
        %v764 = vlaneseq
        %v765 = vshrl.u32 %v764, 7
        %v766 = vsub.s32 0, %v765
        %v767 = vrot.slane %v618, %v766
        %769 = vbcast.lane.b32.xlu0 %v767, 256
        %v770 = vpop.permute.xlu0 %769
        %s772 = sor.u32 256, 8
        %773 = vbcast.lane.b32.xlu0 %v767, %s772
        %v774 = vpop.permute.xlu0 %773
        %s776 = sor.u32 256, 16
        %777 = vbcast.lane.b32.xlu0 %v767, %s776
        %v778 = vpop.permute.xlu0 %777
        %s780 = sor.u32 256, 24
        %781 = vbcast.lane.b32.xlu0 %v767, %s780
        %v782 = vpop.permute.xlu0 %781
        %s784 = sor.u32 256, 32
        %785 = vbcast.lane.b32.xlu0 %v767, %s784
        %v786 = vpop.permute.xlu0 %785
        %s788 = sor.u32 256, 40
        %789 = vbcast.lane.b32.xlu0 %v767, %s788
        %v790 = vpop.permute.xlu0 %789
        %s792 = sor.u32 256, 48
        %793 = vbcast.lane.b32.xlu0 %v767, %s792
        %v794 = vpop.permute.xlu0 %793
        %s796 = sor.u32 256, 56
        %797 = vbcast.lane.b32.xlu0 %v767, %s796
        %v798 = vpop.permute.xlu0 %797
        %v799 = vmul.f32 %v718, %v770
        %v800 = vmul.f32 %v720, %v770
        %v801 = vmul.f32 %v724, %v774
        %v802 = vmul.f32 %v726, %v774
        %v803 = vmul.f32 %v730, %v778
        %v804 = vmul.f32 %v732, %v778
        %v805 = vmul.f32 %v736, %v782
        %v806 = vmul.f32 %v738, %v782
        %v807 = vmul.f32 %v742, %v786
        %v808 = vmul.f32 %v744, %v786
        %v809 = vmul.f32 %v748, %v790
        %v810 = vmul.f32 %v750, %v790
        %v811 = vmul.f32 %v754, %v794
        %v812 = vmul.f32 %v756, %v794
        %v813 = vmul.f32 %v760, %v798
        %v814 = vmul.f32 %v762, %v798
        %815 = vst [vmem:[%s322] sm:$0xff] %v799
        %816 = vst [vmem:[%s322 + $0x8] sm:$0xff] %v800
        %817 = vst [vmem:[%s322 + $0x10] sm:$0xff] %v801
        %818 = vst [vmem:[%s322 + $0x18] sm:$0xff] %v802
        %819 = vst [vmem:[%s322 + $0x20] sm:$0xff] %v803
        %820 = vst [vmem:[%s322 + $0x28] sm:$0xff] %v804
        %821 = vst [vmem:[%s322 + $0x30] sm:$0xff] %v805
        %822 = vst [vmem:[%s322 + $0x38] sm:$0xff] %v806
        %823 = vst [vmem:[%s322 + $0x40] sm:$0xff] %v807
        %824 = vst [vmem:[%s322 + $0x48] sm:$0xff] %v808
        %825 = vst [vmem:[%s322 + $0x50] sm:$0xff] %v809
        %826 = vst [vmem:[%s322 + $0x58] sm:$0xff] %v810
        %827 = vst [vmem:[%s322 + $0x60] sm:$0xff] %v811
        %828 = vst [vmem:[%s322 + $0x68] sm:$0xff] %v812
        %829 = vst [vmem:[%s322 + $0x70] sm:$0xff] %v813
        %830 = vst [vmem:[%s322 + $0x78] sm:$0xff] %v814
        %s831 = sand.u32 %s207, 1
        %s832 = scalar_lea.sflag [#allocation3], %s831
        %s833 = sand.u32 %s207, 1
        %s834 = smul.addr %s833, 128
        %s835 = scalar_lea.vmem [#allocation2], %s834
        // Predicated region
        $region49: #{tpu_custom_call.1} parent=47 // pred_check
          %p836 = pneg %p217
        $region50: #{tpu_custom_call.1} parent=47 // pred_check_branch
          %838 = sbr.rel (%p836) target = $region52
        $region51: #{tpu_custom_call.1} parent=47 // pred_region
          %s839 = smul.u32 2, %s26
          %s841 = ssub.s32 2048, 2048
          %842 = vsyncadd %s832, %s841
          %s843 = smul.addr %s25, 16
          %s844 = sadd.s32 %s839, %s843
          %s845 = smul.addr %s844, 128
          %s846 = scalar_lea.hbm %s7, %s845
          %s847 = sshll.u32 %s835, 4
          %s848 = int_to_ptr.vmem [resolvable:$true] %s847
          %853 = dma.vmem_to_hbm [thread:$0]  %s848, 2048, %s846, %s832, 256, 256, 16
        $region52: #{tpu_custom_call.1} parent=47 // pred_fallthru
          _
      $region48: #{tpu_custom_call.1} parent=5 // pred_fallthru
        _
      %p854 = scmp.le.s32.totalorder 2, %s16
      // Predicated region
      $region53: #{tpu_custom_call.1} parent=5 // pred_check
        %p855 = pneg %p854
      $region54: #{tpu_custom_call.1} parent=5 // pred_check_branch
        %857 = sbr.rel (%p855) target = $region56
      $region55: #{tpu_custom_call.1} parent=5 // pred_region
        %s858 = ssub.s32 %s16, 2
        // Predicated region
        $region57: #{tpu_custom_call.1} parent=55 // pred_check
          %p859 = pneg %p223
        $region58: #{tpu_custom_call.1} parent=55 // pred_check_branch
          %861 = sbr.rel (%p859) target = $region60
        $region59: #{tpu_custom_call.1} parent=55 // pred_region
          %s862 = sand.u32 %s208, 1
          %s863 = scalar_lea.sflag [#allocation3], %s862
          %s864 = sand.u32 %s208, 1
          %s865 = smul.addr %s864, 128
          %s866 = scalar_lea.vmem [#allocation2], %s865
          %867 = dma.done %s863, 2048
        $region60: #{tpu_custom_call.1} parent=55 // pred_fallthru
          _
      $region56: #{tpu_custom_call.1} parent=5 // pred_fallthru
        _
    $region6: #{tpu_custom_call.1} parent=1 // loop_footer
      %s20 = sadd.s32 1, %s16
    $region7: #{tpu_custom_call.1} parent=1 // loop_footer_branch
      %15 = sbr.rel target = $region3
    $region8: #{tpu_custom_call.1} parent=1 // loop_exit
      _
    %868 = vsyncpa [#allocation3], 1
    %s869 = scalar_lea.sflag [#allocation3], 1
    %870 = vsyncpa %s869, 1

</llo_original>
